<compile_context>
chip_gen: v7x
topology: tpu7x:2x2x1
jax: 0.10.0
libtpu: 0.0.40
codegen_flags: <defaults>
</compile_context>

<pallas_src>
import functools

import jax
import jax.numpy as jnp
from jax.experimental import pallas as pl
from jax.experimental.pallas import tpu as pltpu


def simplenet_kernel(xt_ref, p_ref, o_ref):
    """Fused MLP block, batch-on-lanes layout.

    xt_ref: [D, TB]        batch tile of inputs, transposed (features on sublanes)
    p_ref:  [H, H+D+4]     packed params:
                             cols 0..H-1   = w2^T  ([out, in])
                             cols H..H+D-1 = w1    ([H, D], i.e. PyTorch fc1.weight)
                             col  H+D      = b1    ([H, 1])
                             col  H+D+1    = b2    ([H, 1])
                             col  H+D+2    = w3    ([H, 1])
                             col  H+D+3    = b3 at row 0, zeros below
    o_ref:  [1, TB]        sigmoid output (lane-dense)
    """
    xt = xt_ref[...]                    # [D, TB] f32
    p = p_ref[...]                      # [H, H+D+4] f32
    d = xt_ref.shape[0]
    h = p_ref.shape[0]

    # --- fc1 + ReLU on the VPU (contraction K=D is tiny; skip the MXU) ------
    acc = p[:, h + d:h + d + 1]         # b1, [H, 1], broadcasts over lanes
    for k in range(d):                  # static unroll over input features
        acc = acc + p[:, h + k:h + k + 1] * xt[k:k + 1, :]   # [H,1]*[1,TB] -> [H,TB]
    h1 = jnp.maximum(acc, 0.0)          # [H, TB]

    # TODO(synk): dropout(p=0.3) implemented as identity (eval / inference mode).

    # --- fc2 on the MXU: [H,H] @ [H,TB] (batch on the lane/N side) ----------
    w2t = p[:, :h]                      # [H, H] == w2^T
    h2 = jnp.dot(w2t, h1, preferred_element_type=jnp.float32)
    h2 = h2 + p[:, h + d + 1:h + d + 2]              # + b2, [H, TB]

    # --- fc3 (out_dim=1): VPU multiply + sublane (XLU) reduction ------------
    w3 = p[:, h + d + 2:h + d + 3]                    # [H, 1]
    b3 = p[0:1, h + d + 3:h + d + 4]                  # [1, 1]
    h3 = jnp.sum(h2 * w3, axis=0, keepdims=True) + b3  # [1, TB]

    o_ref[...] = jax.nn.sigmoid(h3).astype(o_ref.dtype)


def _round_up(n, m):
    return ((n + m - 1) // m) * m


def _cdiv(a, b):
    return -(-a // b)


def _choose_tiling(batch, block_b):
    """Pick (tile_b, padded_b): lane-multiple tiles, minimal dead rows, >=2 blocks
    when there is enough work (feeds both v7x TensorCores; harmless on v5e/v6e)."""
    lane = 128
    b_lane = _round_up(max(batch, 1), lane)
    n = _cdiv(b_lane, max(block_b, lane))
    if n == 1 and b_lane >= 2 * lane:
        n = 2
    tb = _round_up(_cdiv(b_lane, n), lane)
    b_pad = _round_up(b_lane, tb)
    return tb, b_pad


@functools.partial(jax.jit, static_argnames=("block_b",))
def simplenet_forward(x, params, *, block_b=32768):
    """Run the fused SimpleNet forward pass via pallas_call.

    x: [B, input_dim] float32
    params: w1 [D,H], b1 [1,H], w2 [H,H], b2 [1,H], w3 [H,1], b3 [1,1]
            (weights stored as [in_features, out_features])
    returns: [B, 1] float32
    """
    B, D = x.shape
    H = params["w2"].shape[0]
    out_dim = params["w3"].shape[1]
    assert out_dim == 1, "kernel's fc3 sublane-reduction path assumes output_dim == 1"

    # Pack ALL parameters into one [H, H+D+4] slab -> a single resident DMA.
    packed = jnp.concatenate(
        [
            params["w2"].T,                                   # cols 0..H-1   (w2^T)
            params["w1"].T,                                   # cols H..H+D-1 (w1 [H,D])
            params["b1"].T,                                   # col  H+D
            params["b2"].T,                                   # col  H+D+1
            params["w3"],                                     # col  H+D+2
            jnp.pad(params["b3"].T, ((0, H - 1), (0, 0))),    # col  H+D+3 (b3 at row 0)
        ],
        axis=1,
    ).astype(jnp.float32)

    # Batch-on-lanes: transpose x once and pad the lane axis to full tiles.
    tb, b_pad = _choose_tiling(B, block_b)
    n_blocks = b_pad // tb
    x_t = x.T.astype(jnp.float32)                 # [D, B]
    if b_pad != B:
        x_t = jnp.pad(x_t, ((0, 0), (0, b_pad - B)))

    out = pl.pallas_call(
        simplenet_kernel,
        out_shape=jax.ShapeDtypeStruct((1, b_pad), jnp.float32),
        grid=(n_blocks,),
        in_specs=[
            pl.BlockSpec((D, tb), lambda i: (0, i)),          # x^T: tiled over lanes
            pl.BlockSpec((H, H + D + 4), lambda i: (0, 0)),   # packed params: resident
        ],
        out_specs=pl.BlockSpec((1, tb), lambda i: (0, i)),    # lane-dense output row
        compiler_params=pltpu.CompilerParams(
            dimension_semantics=("parallel",),
        ),
    )(x_t, packed)

    return out[0, :B][:, None]                    # -> [B, 1]


def init_params(key, input_dim, hidden_dim, output_dim):
    """Deterministic init mimicking nn.Linear's U(-1/sqrt(fan_in), +1/sqrt(fan_in)).

    Weights are stored as [in_features, out_features] (PyTorch weight transposed).
    """
    def linear_init(k, fan_in, fan_out):
        kw, kb = jax.random.split(k)
        bound = 1.0 / jnp.sqrt(fan_in)
        w = jax.random.uniform(kw, (fan_in, fan_out), jnp.float32, -bound, bound)
        b = jax.random.uniform(kb, (1, fan_out), jnp.float32, -bound, bound)
        return w, b

    k1, k2, k3 = jax.random.split(key, 3)
    w1, b1 = linear_init(k1, input_dim, hidden_dim)
    w2, b2 = linear_init(k2, hidden_dim, hidden_dim)
    w3, b3 = linear_init(k3, hidden_dim, output_dim)
    return {"w1": w1, "b1": b1, "w2": w2, "b2": b2, "w3": w3, "b3": b3}


def reference_forward(x, p):
    """Pure-JAX reference for correctness check."""
    h1 = jnp.maximum(x @ p["w1"] + p["b1"], 0.0)
    h2 = h1 @ p["w2"] + p["b2"]
    h3 = h2 @ p["w3"] + p["b3"]
    return jax.nn.sigmoid(h3)


if __name__ == "__main__":
    # Moon data: 2 input features, 1 sigmoid output; small hidden layer.
    input_dim, hidden_dim, output_dim = 2, 32, 1
    batch = 8

    key = jax.random.PRNGKey(0)
    k_params, k_x = jax.random.split(key)

    params = init_params(k_params, input_dim, hidden_dim, output_dim)
    x = jax.random.normal(k_x, (batch, input_dim), dtype=jnp.float32)

    out = simplenet_forward(x, params)
    out = jax.block_until_ready(out)

    ref = reference_forward(x, params)
    assert out.shape == (batch, output_dim)
    assert jnp.allclose(out, ref, atol=1e-5, rtol=1e-5), "mismatch vs reference"

    # Also exercise a batch that is not a multiple of the tile (multi-block path,
    # padded lanes sliced off outside the kernel).
    x_big = jax.random.normal(k_x, (1000, input_dim), dtype=jnp.float32)
    out_big = jax.block_until_ready(simplenet_forward(x_big, params))
    assert out_big.shape == (1000, output_dim)
    assert jnp.allclose(out_big, reference_forward(x_big, params), atol=1e-5, rtol=1e-5)

    print("KERNEL_OK")
</pallas_src>

<mosaic_0001>
module attributes {stable_mosaic.version = 11 : i64} {
  func.func @simplenet_kernel(%arg0: i32, %arg1: memref<2x128xf32, #tpu.memory_space<vmem>>, %arg2: memref<32x38xf32, #tpu.memory_space<vmem>>, %arg3: memref<1x128xf32, #tpu.memory_space<vmem>>) attributes {dimension_semantics = [#tpu.dimension_semantics<parallel>], iteration_bounds = array<i64: 1>, scalar_prefetch = 0 : i64, scratch_operands = 0 : i64, tpu.core_type = #tpu.core_type<tc>, window_params = [{transform_indices = @transform_0, window_bounds = array<i64: 2, 128>}, {pipeline_mode = #tpu.pipeline_mode<synchronous>, transform_indices = @transform_1, window_bounds = array<i64: 32, 38>}, {transform_indices = @transform_2, window_bounds = array<i64: 1, 128>}]} {
    %c0 = arith.constant 0 : index
    %c0_0 = arith.constant 0 : index
    %0 = vector.load %arg1[%c0, %c0_0] : memref<2x128xf32, #tpu.memory_space<vmem>>, vector<2x128xf32>
    %c0_1 = arith.constant 0 : index
    %c0_2 = arith.constant 0 : index
    %1 = vector.load %arg2[%c0_1, %c0_2] : memref<32x38xf32, #tpu.memory_space<vmem>>, vector<32x38xf32>
    %2 = vector.extract_strided_slice %1 {offsets = [0, 34], sizes = [32, 1], strides = [1, 1]} : vector<32x38xf32> to vector<32x1xf32>
    %3 = vector.extract_strided_slice %1 {offsets = [0, 32], sizes = [32, 1], strides = [1, 1]} : vector<32x38xf32> to vector<32x1xf32>
    %4 = vector.extract_strided_slice %0 {offsets = [0, 0], sizes = [1, 128], strides = [1, 1]} : vector<2x128xf32> to vector<1x128xf32>
    %5 = vector.broadcast %3 : vector<32x1xf32> to vector<32x128xf32>
    %6 = vector.broadcast %4 : vector<1x128xf32> to vector<32x128xf32>
    %7 = arith.mulf %5, %6 : vector<32x128xf32>
    %8 = vector.broadcast %2 : vector<32x1xf32> to vector<32x128xf32>
    %9 = arith.addf %8, %7 : vector<32x128xf32>
    %10 = vector.extract_strided_slice %1 {offsets = [0, 33], sizes = [32, 1], strides = [1, 1]} : vector<32x38xf32> to vector<32x1xf32>
    %11 = vector.extract_strided_slice %0 {offsets = [1, 0], sizes = [1, 128], strides = [1, 1]} : vector<2x128xf32> to vector<1x128xf32>
    %12 = vector.broadcast %10 : vector<32x1xf32> to vector<32x128xf32>
    %13 = vector.broadcast %11 : vector<1x128xf32> to vector<32x128xf32>
    %14 = arith.mulf %12, %13 : vector<32x128xf32>
    %15 = arith.addf %9, %14 : vector<32x128xf32>
    %cst = arith.constant 0.000000e+00 : f32
    %16 = vector.broadcast %cst : f32 to vector<32x128xf32>
    %17 = arith.maximumf %15, %16 : vector<32x128xf32>
    %18 = vector.extract_strided_slice %1 {offsets = [0, 0], sizes = [32, 32], strides = [1, 1]} : vector<32x38xf32> to vector<32x32xf32>
    %cst_3 = arith.constant dense<0.000000e+00> : vector<32x128xf32>
    %19 = tpu.matmul %18, %17, %cst_3 {dimension_numbers = #tpu.dot_dimension_numbers<[1], [0], [0], [1], [0, 0, 1, 1], [], []>} : vector<32x32xf32>, vector<32x128xf32>, vector<32x128xf32> -> vector<32x128xf32>
    %20 = vector.extract_strided_slice %1 {offsets = [0, 35], sizes = [32, 1], strides = [1, 1]} : vector<32x38xf32> to vector<32x1xf32>
    %21 = vector.broadcast %20 : vector<32x1xf32> to vector<32x128xf32>
    %22 = arith.addf %19, %21 : vector<32x128xf32>
    %23 = vector.extract_strided_slice %1 {offsets = [0, 36], sizes = [32, 1], strides = [1, 1]} : vector<32x38xf32> to vector<32x1xf32>
    %24 = vector.extract_strided_slice %1 {offsets = [0, 37], sizes = [1, 1], strides = [1, 1]} : vector<32x38xf32> to vector<1x1xf32>
    %25 = vector.broadcast %23 : vector<32x1xf32> to vector<32x128xf32>
    %26 = arith.mulf %22, %25 : vector<32x128xf32>
    %cst_4 = arith.constant dense<0.000000e+00> : vector<128xf32>
    %27 = vector.multi_reduction <add>, %26, %cst_4 [0] : vector<32x128xf32> to vector<128xf32>
    %28 = vector.shape_cast %27 : vector<128xf32> to vector<1x128xf32>
    %29 = vector.broadcast %24 : vector<1x1xf32> to vector<1x128xf32>
    %30 = arith.addf %28, %29 : vector<1x128xf32>
    %31 = arith.negf %30 : vector<1x128xf32>
    %32 = math.exp %31 : vector<1x128xf32>
    %cst_5 = arith.constant 1.000000e+00 : f32
    %33 = vector.broadcast %cst_5 : f32 to vector<1x128xf32>
    %34 = arith.addf %33, %32 : vector<1x128xf32>
    %35 = arith.divf %33, %34 : vector<1x128xf32>
    %c0_6 = arith.constant 0 : index
    %c0_7 = arith.constant 0 : index
    %36 = vector.load %arg3[%c0_6, %c0_7] : memref<1x128xf32, #tpu.memory_space<vmem>>, vector<1x128xf32>
    tpu.vector_store %arg3[%c0_6, %c0_7], %35 {strides = array<i32>} : memref<1x128xf32, #tpu.memory_space<vmem>>, vector<1x128xf32>,
    return
  }
  func.func @transform_0(%arg0: i32) -> (i32, i32) {
    %c0_i32 = arith.constant 0 : i32
    %c0_i32_0 = arith.constant 0 : i32
    return %c0_i32, %arg0 : i32, i32
  }
  func.func @transform_1(%arg0: i32) -> (i32, i32) {
    %c0_i32 = arith.constant 0 : i32
    %c0_i32_0 = arith.constant 0 : i32
    %c0_i32_1 = arith.constant 0 : i32
    return %c0_i32, %c0_i32_0 : i32, i32
  }
  func.func @transform_2(%arg0: i32) -> (i32, i32) {
    %c0_i32 = arith.constant 0 : i32
    %c0_i32_0 = arith.constant 0 : i32
    return %c0_i32, %arg0 : i32, i32
  }
}

</mosaic_0001>

<llo_original>
// kernel: simplenet_forward.1
$region0: #{simplenet_forward.1}
  #allocation0 [shape = 'u32[]', space=smem, size = 0x4, offset = 0x4, fixed_abs, tag = 'smem constant byte address 0x4 - core index']
  #allocation1 [shape = 'u32[144,128]{1,0:T(1,128)}', space=vmem, size = 0x12000, scoped, tag = 'internal scratch']
  %s0 = inlined_call_operand.vmem [shape: f32[2,128], index: 0, kind: input, shape index: {}]
  %s1 = inlined_call_operand.vmem [shape: f32[32,38], index: 1, kind: input, shape index: {}]
  %s2 = inlined_call_operand.vmem [shape: f32[1,128], index: 2, kind: output, shape index: {}]
  %s3 = sld [smem:[#allocation0]]
  $region18: #{simplenet_forward.1} parent=0
    _
  %s5 = ssub.s32 1, %s3
  %s6 = scalar_select 0, %s5, %s3
  // Predicated region
  $region2: #{simplenet_forward.1} parent=0 // pred_check
    _
  $region3: #{simplenet_forward.1} parent=0 // pred_check_branch
    %8 = sbr.rel (0) target = $region5
  $region4: #{simplenet_forward.1} parent=0 // pred_region
    _
  $region5: #{simplenet_forward.1} parent=0 // pred_fallthru
    _
  // Predicated region
  $region6: #{simplenet_forward.1} parent=0 // pred_check
    _
  $region7: #{simplenet_forward.1} parent=0 // pred_check_branch
    %10 = sbr.rel (0) target = $region9
  $region8: #{simplenet_forward.1} parent=0 // pred_region
    _
  $region9: #{simplenet_forward.1} parent=0 // pred_fallthru
    _
  %v11 = vld [vmem:[%s0] sm:$0x3]
  %v12 = vld [vmem:[%s1] sm:$0xff]
  %v13 = vld [vmem:[%s1 + $0x8] sm:$0xff]
  %v14 = vld [vmem:[%s1 + $0x10] sm:$0xff]
  %v15 = vld [vmem:[%s1 + $0x18] sm:$0xff]
  %17 = vset.pattern.permute.xlu0 32
  %18 = vperm.xlu0 %17, %v12
  %v19 = vpop.permute.xlu0 %18
  %22 = vset.pattern.permute.xlu0 32
  %23 = vperm.xlu0 %22, %v13
  %v24 = vpop.permute.xlu0 %23
  %27 = vset.pattern.permute.xlu0 32
  %28 = vperm.xlu0 %27, %v14
  %v29 = vpop.permute.xlu0 %28
  %32 = vset.pattern.permute.xlu0 32
  %33 = vperm.xlu0 %32, %v15
  %v34 = vpop.permute.xlu0 %33
  %v36 = vlaneseq
  %v37 = vshrl.u32 %v36, 7
  %v38 = vsub.s32 0, %v37
  %v39 = vrot.slane %v11, %v38
  %v40 = vmul.f32 %v19, %v39
  %v41 = vmul.f32 %v24, %v39
  %v42 = vmul.f32 %v29, %v39
  %v43 = vmul.f32 %v34, %v39
  %44 = vset.pattern.permute.xlu0 34
  %45 = vperm.xlu0 %44, %v12
  %v46 = vpop.permute.xlu0 %45
  %48 = vset.pattern.permute.xlu0 34
  %49 = vperm.xlu0 %48, %v13
  %v50 = vpop.permute.xlu0 %49
  %52 = vset.pattern.permute.xlu0 34
  %53 = vperm.xlu0 %52, %v14
  %v54 = vpop.permute.xlu0 %53
  %56 = vset.pattern.permute.xlu0 34
  %57 = vperm.xlu0 %56, %v15
  %v58 = vpop.permute.xlu0 %57
  %v60 = vadd.f32 %v46, %v40
  %v61 = vadd.f32 %v50, %v41
  %v62 = vadd.f32 %v54, %v42
  %v63 = vadd.f32 %v58, %v43
  %64 = vset.pattern.permute.xlu0 33
  %65 = vperm.xlu0 %64, %v12
  %v66 = vpop.permute.xlu0 %65
  %68 = vset.pattern.permute.xlu0 33
  %69 = vperm.xlu0 %68, %v13
  %v70 = vpop.permute.xlu0 %69
  %72 = vset.pattern.permute.xlu0 33
  %73 = vperm.xlu0 %72, %v14
  %v74 = vpop.permute.xlu0 %73
  %76 = vset.pattern.permute.xlu0 33
  %77 = vperm.xlu0 %76, %v15
  %v78 = vpop.permute.xlu0 %77
  %v80 = vlaneseq
  %v81 = vshrl.u32 %v80, 7
  %v82 = vsub.s32 1, %v81
  %v83 = vrot.slane %v11, %v82
  %v84 = vmul.f32 %v66, %v83
  %v85 = vmul.f32 %v70, %v83
  %v86 = vmul.f32 %v74, %v83
  %v87 = vmul.f32 %v78, %v83
  %v88 = vadd.f32 %v60, %v84
  %v89 = vadd.f32 %v61, %v85
  %v90 = vadd.f32 %v62, %v86
  %v91 = vadd.f32 %v63, %v87
  %v92 = vmax.f32 %v88, 0.0
  %v93 = vmax.f32 %v89, 0.0
  %v94 = vmax.f32 %v90, 0.0
  %v95 = vmax.f32 %v91, 0.0
  %96 = vset.pattern.permute.xlu0 35
  %97 = vperm.xlu0 %96, %v12
  %v98 = vpop.permute.xlu0 %97
  %100 = vset.pattern.permute.xlu0 35
  %101 = vperm.xlu0 %100, %v13
  %v102 = vpop.permute.xlu0 %101
  %104 = vset.pattern.permute.xlu0 35
  %105 = vperm.xlu0 %104, %v14
  %v106 = vpop.permute.xlu0 %105
  %108 = vset.pattern.permute.xlu0 35
  %109 = vperm.xlu0 %108, %v15
  %v110 = vpop.permute.xlu0 %109
  %vm112 = vcmask 261120
  %v113 = vsel %vm112, %v12, 0
  %v115 = vsel %vm112, %v13, 0
  %v117 = vsel %vm112, %v14, 0
  %v119 = vsel %vm112, %v15, 0
  %121 = vmatprep.subr.mxu0 0.0
  %122 = vmatpush1.msra.mxu0 %v92
  %123 = vmatprep.subr.mxu0 0.0
  %124 = vmatpush1.msra.mxu0 %v93
  %125 = vmatprep.subr.mxu0 0.0
  %126 = vmatpush1.msra.mxu0 %v94
  %127 = vmatprep.subr.mxu0 0.0
  %128 = vmatpush1.msra.mxu0 %v95
  %129 = vmatprep.subr.mxu0 0.0
  %130 = vmatpush1.msra.mxu0 0.0
  %131 = vmatprep.subr.mxu0 0.0
  %132 = vmatpush1.msra.mxu0 0.0
  %133 = vmatprep.subr.mxu0 0.0
  %134 = vmatpush1.msra.mxu0 0.0
  %135 = vmatprep.subr.mxu0 0.0
  %136 = vmatpush1.msra.mxu0 0.0
  %137 = vmatprep.subr.mxu0 0.0
  %138 = vmatpush1.msra.mxu0 0.0
  %139 = vmatprep.subr.mxu0 0.0
  %140 = vmatpush1.msra.mxu0 0.0
  %141 = vmatprep.subr.mxu0 0.0
  %142 = vmatpush1.msra.mxu0 0.0
  %143 = vmatprep.subr.mxu0 0.0
  %144 = vmatpush1.msra.mxu0 0.0
  %145 = vmatprep.subr.mxu0 0.0
  %146 = vmatpush1.msra.mxu0 0.0
  %147 = vmatprep.subr.mxu0 0.0
  %148 = vmatpush1.msra.mxu0 0.0
  %149 = vmatprep.subr.mxu0 0.0
  %150 = vmatpush1.msra.mxu0 0.0
  %151 = vmatprep.subr.mxu0 0.0
  %152 = vmatpush1.msra.mxu0 0.0
  %153 = vmatprep.subr.mxu0 0.0
  %154 = vmatpush1.msra.mxu0 0.0
  %155 = vmatprep.subr.mxu0 0.0
  %156 = vmatpush1.msra.mxu0 0.0
  %157 = vmatprep.subr.mxu0 0.0
  %158 = vmatpush1.msra.mxu0 0.0
  %159 = vmatprep.subr.mxu0 0.0
  %160 = vmatpush1.msra.mxu0 0.0
  %161 = vmatprep.subr.mxu0 0.0
  %162 = vmatpush1.msra.mxu0 0.0
  %163 = vmatprep.subr.mxu0 0.0
  %164 = vmatpush1.msra.mxu0 0.0
  %165 = vmatprep.subr.mxu0 0.0
  %166 = vmatpush1.msra.mxu0 0.0
  %167 = vmatprep.subr.mxu0 0.0
  %168 = vmatpush1.msra.mxu0 0.0
  %169 = vmatprep.subr.mxu0 0.0
  %170 = vmatpush1.msra.mxu0 0.0
  %171 = vmatprep.subr.mxu0 0.0
  %172 = vmatpush1.msra.mxu0 0.0
  %173 = vmatprep.subr.mxu0 0.0
  %174 = vmatpush1.msra.mxu0 0.0
  %175 = vmatprep.subr.mxu0 0.0
  %176 = vmatpush1.msra.mxu0 0.0
  %177 = vmatprep.subr.mxu0 0.0
  %178 = vmatpush1.msra.mxu0 0.0
  %179 = vmatprep.subr.mxu0 0.0
  %180 = vmatpush1.msra.mxu0 0.0
  %181 = vmatprep.subr.mxu0 0.0
  %182 = vmatpush1.msra.mxu0 0.0
  %183 = vmatprep.subr.mxu0 0.0
  %184 = vmatpush1.msra.mxu0 0.0
  %185 = vmatprep.mubr.f32.mxu0 0.0
  %186 = vmatmul.mubr.f32.gmra.mrb[0].mxu0 %v113
  %v187 = vpop.f32.mrb[0].mxu0
  %v188 = vadd.f32 %v98, %v187
  %v189 = vpop.f32.mrb[0].mxu0
  %190 = vmatprep.mubr.f32.mxu0 0.0
  %191 = vmatmul.mubr.f32.gmra.mrb[0].mxu0 %v115
  %v192 = vpop.f32.mrb[0].mxu0
  %v193 = vadd.f32 %v102, %v192
  %v194 = vpop.f32.mrb[0].mxu0
  %195 = vmatprep.mubr.f32.mxu0 0.0
  %196 = vmatmul.mubr.f32.gmra.mrb[0].mxu0 %v117
  %v197 = vpop.f32.mrb[0].mxu0
  %v198 = vadd.f32 %v106, %v197
  %v199 = vpop.f32.mrb[0].mxu0
  %200 = vmatprep.mubr.f32.mxu0 0.0
  %201 = vmatmul.mubr.f32.gmra.mrb[0].mxu0 %v119
  %v202 = vpop.f32.mrb[0].mxu0
  %v203 = vadd.f32 %v110, %v202
  %v204 = vpop.f32.mrb[0].mxu0
  %205 = vdwg.mxu0
  %206 = vset.pattern.permute.xlu0 36
  %207 = vperm.xlu0 %206, %v12
  %v208 = vpop.permute.xlu0 %207
  %210 = vset.pattern.permute.xlu0 36
  %211 = vperm.xlu0 %210, %v13
  %v212 = vpop.permute.xlu0 %211
  %214 = vset.pattern.permute.xlu0 36
  %215 = vperm.xlu0 %214, %v14
  %v216 = vpop.permute.xlu0 %215
  %218 = vset.pattern.permute.xlu0 36
  %219 = vperm.xlu0 %218, %v15
  %v220 = vpop.permute.xlu0 %219
  %v222 = vmul.f32 %v188, %v208
  %v223 = vmul.f32 %v193, %v212
  %v224 = vmul.f32 %v198, %v216
  %v225 = vmul.f32 %v203, %v220
  %v226 = vadd.f32 %v222, %v223
  %v227 = vadd.f32 %v226, %v224
  %v228 = vadd.f32 %v227, %v225
  %v229 = vrot.slane %v228, 4
  %v230 = vadd.f32 %v228, %v229
  %v231 = vrot.slane %v230, 2
  %v232 = vadd.f32 %v230, %v231
  %v233 = vrot.slane %v232, 1
  %v234 = vadd.f32 %v232, %v233
  %235 = vset.pattern.permute.xlu0 37
  %236 = vperm.xlu0 %235, %v12
  %v237 = vpop.permute.xlu0 %236
  %v239 = vadd.f32 %v234, %v237
  %v240 = vxor.u32 %v239, 2147483648
  %v241 = vmul.f32 %v240, 1.442695
  %v242 = vpow.pop %v241
  %v243 = vadd.f32 %v242, 1.0
  %v244 = vrcp.pop %v243
  %v245 = vmul.f32 1.0, %v244
  %246 = vst [vmem:[%s2] sm:$0x1] %v245
  // Predicated region
  $region10: #{simplenet_forward.1} parent=0 // pred_check
    _
  $region11: #{simplenet_forward.1} parent=0 // pred_check_branch
    %248 = sbr.rel (0) target = $region13
  $region12: #{simplenet_forward.1} parent=0 // pred_region
    _
  $region13: #{simplenet_forward.1} parent=0 // pred_fallthru
    _
  // Predicated region
  $region14: #{simplenet_forward.1} parent=0 // pred_check
    _
  $region15: #{simplenet_forward.1} parent=0 // pred_check_branch
    %250 = sbr.rel (0) target = $region17
  $region16: #{simplenet_forward.1} parent=0 // pred_region
    _
  $region17: #{simplenet_forward.1} parent=0 // pred_fallthru
    _

</llo_original>
